<compile_context>
chip_gen: v5e
topology: v5e:2x2
jax: 0.10.0
libtpu: 0.0.40
codegen_flags: <defaults>
</compile_context>

<pallas_src>
import functools

import jax
import jax.numpy as jnp
from jax.experimental import pallas as pl
from jax.experimental.pallas import tpu as pltpu


def _round_up(x, m):
    return ((x + m - 1) // m) * m


def _contrastive_loss_kernel(x1_ref, x2_ref, y_ref, out_ref, *, margin, batch, block_rows):
    """One batch tile: per-row contrastive terms, masked row-sum -> SMEM scalar."""
    i = pl.program_id(0)

    # Load native dtype, upcast to f32 for the arithmetic (v5e VPU/EUP have no
    # bf16 support; VALU has huge slack so the upcast is free).
    x1 = x1_ref[...].astype(jnp.float32)                       # (TB, D)
    x2 = x2_ref[...].astype(jnp.float32)                       # (TB, D)
    y = y_ref[...].astype(jnp.float32)                         # (TB, 1)

    diff = x1 - x2
    dist_sq = jnp.sum(diff * diff, axis=1, keepdims=True)      # (TB, 1)
    dist = jnp.sqrt(dist_sq)                                   # EUP slot, free
    clamped = jnp.maximum(margin - dist, 0.0)                  # torch.clamp(min=0)
    per_row = y * dist_sq + (1.0 - y) * (clamped * clamped)    # (TB, 1)

    # Rows past the true batch size hold garbage from the partially-filled last
    # window. Keep this as a jnp.where *select* (NOT a multiplicative mask):
    # NaN/Inf in the discarded branch is dropped by the select.
    row_ids = i * block_rows + jax.lax.broadcasted_iota(jnp.int32, (block_rows, 1), 0)
    per_row = jnp.where(row_ids < batch, per_row, 0.0)

    out_ref[0, 0] = jnp.sum(per_row)                           # partial sum for this tile


def _vmem_budget():
    """Returns (stream_budget_bytes, vmem_limit_bytes), generation aware."""
    vmem_bytes = None
    try:
        info = pltpu.get_tpu_info()
        vmem_bytes = getattr(info, "vmem_capacity_bytes", None)
    except Exception:
        vmem_bytes = None
    if not vmem_bytes:
        # Unknown generation: assume the smallest per-TensorCore VMEM (v7x).
        vmem_bytes = 64 * 1024 * 1024
    if vmem_bytes >= 128 * 1024 * 1024:
        # v5e / v6e: 128 MiB physical VMEM -> larger windows, explicit limit
        # well above the 16/32 MiB scoped defaults but with headroom.
        return 56 * 1024 * 1024, 96 * 1024 * 1024
    # v7x: 64 MiB per TensorCore -> stay well below the physical ceiling so the
    # compiler has room for internal scratch / pipeline buffers.
    return 24 * 1024 * 1024, 48 * 1024 * 1024


def contrastive_loss(input1, input2, y, margin=1.0):
    """Pallas TPU implementation of ContrastiveLoss.forward.

    input1, input2: (B, D) float32/bfloat16 embeddings (bf16 halves HBM traffic)
    y:              (B,)   labels (0/1)
    returns: scalar float32 loss
    """
    B, D = input1.shape
    itemsize = jnp.dtype(input1.dtype).itemsize
    stream_budget, vmem_limit = _vmem_budget()

    # VMEM footprint per batch row per grid step:
    #   2 input streams x 2 pipeline buffers (native dtype)   -> the HBM traffic
    # + allowance for the f32 upcast/diff intermediates of one tile
    # + the (TB, 1) y window, lane-padded to 128 lanes, double buffered
    bytes_per_row = 2 * 2 * D * itemsize + 2 * D * 4 + 2 * 128 * 4
    max_tb_rows = max(8, stream_budget // max(bytes_per_row, 1))

    # Target ~2 MiB of DMA per input window per grid step (roofline sweet spot),
    # clipped by the VMEM budget and the (8-aligned) batch size.
    target_rows = max(8, (2 * 1024 * 1024) // max(D * itemsize, 1))
    TB = min(target_rows, max_tb_rows, _round_up(B, 8))
    if B > 8:
        # Keep at least two grid tiles so the "parallel" axis can be split
        # across both v7x TensorCores (each TC streams from its own VMEM).
        TB = min(TB, _round_up(pl.cdiv(B, 2), 8))
    TB = max(8, (TB // 8) * 8)
    num_tiles = pl.cdiv(B, TB)

    y2d = y.reshape(B, 1)  # tiny; upcast happens in-kernel

    kernel = functools.partial(
        _contrastive_loss_kernel, margin=float(margin), batch=B, block_rows=TB
    )

    # Advisory cost so XLA can overlap this bandwidth-bound call with neighbors.
    cost = pl.CostEstimate(
        flops=3 * B * D + 8 * B,
        transcendentals=B,  # one sqrt per row
        bytes_accessed=2 * B * D * itemsize
        + B * jnp.dtype(y.dtype).itemsize
        + num_tiles * 4,
    )

    partials = pl.pallas_call(
        kernel,
        out_shape=jax.ShapeDtypeStruct((num_tiles, 1), jnp.float32),
        grid_spec=pltpu.PrefetchScalarGridSpec(
            num_scalar_prefetch=0,
            grid=(num_tiles,),
            in_specs=[
                pl.BlockSpec((TB, D), lambda i: (i, 0)),
                pl.BlockSpec((TB, D), lambda i: (i, 0)),
                pl.BlockSpec((TB, 1), lambda i: (i, 0)),
            ],
            out_specs=pl.BlockSpec((1, 1), lambda i: (i, 0), memory_space=pltpu.SMEM),
        ),
        compiler_params=pltpu.CompilerParams(
            dimension_semantics=("parallel",),
            vmem_limit_bytes=vmem_limit,
        ),
        cost_estimate=cost,
    )(input1, input2, y2d)

    # Final reduction + single fused scale (0.5 / B) on a few-KB array: free.
    return jnp.sum(partials) * (0.5 / float(B))


def _reference(input1, input2, y, margin=1.0):
    diff = input1.astype(jnp.float32) - input2.astype(jnp.float32)
    dist_sq = jnp.sum(diff ** 2, axis=1)
    dist = jnp.sqrt(dist_sq)
    clamped = jnp.maximum(margin - dist, 0.0)
    loss = y * dist_sq + (1 - y) * clamped ** 2
    return jnp.sum(loss) / 2.0 / input1.shape[0]


if __name__ == "__main__":
    key = jax.random.PRNGKey(0)
    k1, k2, k3 = jax.random.split(key, 3)

    # Small single-tile case (matches the module's expected usage).
    B, D = 8, 32
    input1 = jax.random.normal(k1, (B, D), dtype=jnp.float32)
    input2 = jax.random.normal(k2, (B, D), dtype=jnp.float32)
    y = jax.random.bernoulli(k3, 0.5, (B,)).astype(jnp.float32)

    loss = contrastive_loss(input1, input2, y, margin=1.0)
    jax.block_until_ready(loss)
    ref = _reference(input1, input2, y, margin=1.0)
    assert jnp.allclose(loss, ref, rtol=1e-5, atol=1e-5), (loss, ref)

    # Multi-tile case with a partial last tile: exercises the grid split
    # (>= 2 tiles for megacore) and the row-mask select on garbage rows.
    B2, D2 = 20, 32
    k4, k5, k6 = jax.random.split(k3, 3)
    a1 = jax.random.normal(k4, (B2, D2), dtype=jnp.float32)
    a2 = jax.random.normal(k5, (B2, D2), dtype=jnp.float32)
    y2 = jax.random.bernoulli(k6, 0.5, (B2,)).astype(jnp.float32)

    loss2 = contrastive_loss(a1, a2, y2, margin=1.0)
    jax.block_until_ready(loss2)
    ref2 = _reference(a1, a2, y2, margin=1.0)
    assert jnp.allclose(loss2, ref2, rtol=1e-5, atol=1e-5), (loss2, ref2)

    print("KERNEL_OK")
</pallas_src>

<mosaic_0001>
module attributes {stable_mosaic.version = 11 : i64} {
  func.func @_contrastive_loss_kernel(%arg0: i32, %arg1: memref<8x32xf32, #tpu.memory_space<vmem>>, %arg2: memref<8x32xf32, #tpu.memory_space<vmem>>, %arg3: memref<8x1xf32, #tpu.memory_space<vmem>>, %arg4: memref<1x1xf32, #tpu.memory_space<smem>>) attributes {dimension_semantics = [#tpu.dimension_semantics<parallel>], iteration_bounds = array<i64: 1>, scalar_prefetch = 0 : i64, scratch_operands = 0 : i64, tpu.core_type = #tpu.core_type<tc>, window_params = [{transform_indices = @transform_0, window_bounds = array<i64: 8, 32>}, {transform_indices = @transform_1, window_bounds = array<i64: 8, 32>}, {transform_indices = @transform_2, window_bounds = array<i64: 8, 1>}, {transform_indices = @transform_3, window_bounds = array<i64: 1, 1>}]} {
    %c0 = arith.constant 0 : index
    %c0_0 = arith.constant 0 : index
    %0 = vector.load %arg1[%c0, %c0_0] : memref<8x32xf32, #tpu.memory_space<vmem>>, vector<8x32xf32>
    %c0_1 = arith.constant 0 : index
    %c0_2 = arith.constant 0 : index
    %1 = vector.load %arg2[%c0_1, %c0_2] : memref<8x32xf32, #tpu.memory_space<vmem>>, vector<8x32xf32>
    %c0_3 = arith.constant 0 : index
    %c0_4 = arith.constant 0 : index
    %2 = vector.load %arg3[%c0_3, %c0_4] : memref<8x1xf32, #tpu.memory_space<vmem>>, vector<8x1xf32>
    %3 = arith.subf %0, %1 : vector<8x32xf32>
    %4 = arith.mulf %3, %3 : vector<8x32xf32>
    %cst = arith.constant dense<0.000000e+00> : vector<8xf32>
    %5 = vector.multi_reduction <add>, %4, %cst [1] : vector<8x32xf32> to vector<8xf32>
    %6 = vector.shape_cast %5 : vector<8xf32> to vector<8x1xf32>
    %7 = math.sqrt %6 : vector<8x1xf32>
    %cst_5 = arith.constant 1.000000e+00 : f32
    %8 = vector.broadcast %cst_5 : f32 to vector<8x1xf32>
    %9 = arith.subf %8, %7 : vector<8x1xf32>
    %cst_6 = arith.constant 0.000000e+00 : f32
    %10 = vector.broadcast %cst_6 : f32 to vector<8x1xf32>
    %11 = arith.maximumf %9, %10 : vector<8x1xf32>
    %12 = arith.mulf %2, %6 : vector<8x1xf32>
    %cst_7 = arith.constant 1.000000e+00 : f32
    %13 = vector.broadcast %cst_7 : f32 to vector<8x1xf32>
    %14 = arith.subf %13, %2 : vector<8x1xf32>
    %15 = arith.mulf %11, %11 : vector<8x1xf32>
    %16 = arith.mulf %14, %15 : vector<8x1xf32>
    %17 = arith.addf %12, %16 : vector<8x1xf32>
    %c8_i32 = arith.constant 8 : i32
    %18 = arith.muli %arg0, %c8_i32 : i32
    %19 = tpu.iota {dimensions = array<i32: 0>} : vector<8x1xi32>
    %20 = vector.broadcast %18 : i32 to vector<8x1xi32>
    %21 = arith.addi %20, %19 : vector<8x1xi32>
    %c8_i32_8 = arith.constant 8 : i32
    %22 = vector.broadcast %c8_i32_8 : i32 to vector<8x1xi32>
    %23 = arith.cmpi slt, %21, %22 : vector<8x1xi32>
    %cst_9 = arith.constant 0.000000e+00 : f32
    %24 = vector.broadcast %cst_9 : f32 to vector<8x1xf32>
    %25 = arith.select %23, %17, %24 : vector<8x1xi1>, vector<8x1xf32>
    %26 = vector.shape_cast %25 : vector<8x1xf32> to vector<1x8x1xf32>
    %cst_10 = arith.constant dense<0.000000e+00> : vector<1xf32>
    %27 = vector.multi_reduction <add>, %26, %cst_10 [1, 2] : vector<1x8x1xf32> to vector<1xf32>
    %28 = vector.shape_cast %27 : vector<1xf32> to vector<1x1x1xf32>
    %29 = vector.extract %28[0, 0, 0] : f32 from vector<1x1x1xf32>
    %c0_11 = arith.constant 0 : index
    %c0_12 = arith.constant 0 : index
    %30 = memref.load %arg4[%c0_11, %c0_12] : memref<1x1xf32, #tpu.memory_space<smem>>
    memref.store %29, %arg4[%c0_11, %c0_12] : memref<1x1xf32, #tpu.memory_space<smem>>
    return
  }
  func.func @transform_0(%arg0: i32) -> (i32, i32) {
    %c0_i32 = arith.constant 0 : i32
    %c0_i32_0 = arith.constant 0 : i32
    return %arg0, %c0_i32 : i32, i32
  }
  func.func @transform_1(%arg0: i32) -> (i32, i32) {
    %c0_i32 = arith.constant 0 : i32
    %c0_i32_0 = arith.constant 0 : i32
    return %arg0, %c0_i32 : i32, i32
  }
  func.func @transform_2(%arg0: i32) -> (i32, i32) {
    %c0_i32 = arith.constant 0 : i32
    %c0_i32_0 = arith.constant 0 : i32
    return %arg0, %c0_i32 : i32, i32
  }
  func.func @transform_3(%arg0: i32) -> (i32, i32) {
    %c0_i32 = arith.constant 0 : i32
    %c0_i32_0 = arith.constant 0 : i32
    return %arg0, %c0_i32 : i32, i32
  }
}

</mosaic_0001>

<llo_original>
// kernel: tpu_custom_call.1
$region0: #{tpu_custom_call.1}
  #allocation0 [shape = 'u32[]', space=smem, size = 0x4, offset = 0x4, fixed_abs, tag = 'smem constant byte address 0x4 - core index']
  #allocation1 [shape = 'u32[72,128]{1,0:T(1,128)}', space=vmem, size = 0x9000, scoped, tag = 'internal scratch']
  %s0 = inlined_call_operand.vmem [shape: f32[8,32], index: 0, kind: input, shape index: {}]
  %s1 = inlined_call_operand.hbm [shape: f32[8,32], index: 1, kind: input, shape index: {}]
  %s2 = inlined_call_operand.vmem [shape: f32[8,1], index: 2, kind: input, shape index: {}]
  %s3 = inlined_call_operand.hbm [shape: f32[1,1], index: 3, kind: output, shape index: {}]
  %s4 = sld [smem:[#allocation0]]
  $region26: #{tpu_custom_call.1} parent=0
    _
  %s6 = ssub.s32 1, %s4
  %s7 = scalar_select 0, %s6, %s4
  $region1: #{tpu_custom_call.1} parent=0
    #allocation2 [shape = 'u8[4096]{0}', space=vmem, size = 0x1000, scoped, tag = 'input window, operand 1, single buffered']
    #allocation3 [shape = 's32[1]{0}', space=sflag, size = 0x4, scoped, tag = 'scoped memory for tpu_custom_call.1']
    #allocation4 [shape = 's32[1]{0}', space=sflag, size = 0x4, scoped, tag = 'scoped memory for tpu_custom_call.1']
    #allocation5 [shape = 'u8[512]{0}', space=smem, size = 0x200, scoped, tag = 'output window, operand 0, single buffered']
    %8 = vsyncpa [#allocation3], 0
    %9 = vsyncpa [#allocation4], 0
    // Predicated region
    $region2: #{tpu_custom_call.1} parent=1 // pred_check
      _
    $region3: #{tpu_custom_call.1} parent=1 // pred_check_branch
      %11 = sbr.rel (0) target = $region5
    $region4: #{tpu_custom_call.1} parent=1 // pred_region
      _
    $region5: #{tpu_custom_call.1} parent=1 // pred_fallthru
      _
    // Predicated region
    $region6: #{tpu_custom_call.1} parent=1 // pred_check
      _
    $region7: #{tpu_custom_call.1} parent=1 // pred_check_branch
      %13 = sbr.rel (0) target = $region9
    $region8: #{tpu_custom_call.1} parent=1 // pred_region
      %15 = vsyncadd [#allocation3], 0
      %s17 = sshll.u32 %s1, 4
      %s18 = int_to_ptr.hbm [resolvable:$true] %s17
      %s19 = sshll.u32 [#allocation2], 4
      %s20 = int_to_ptr.vmem [resolvable:$true] %s19
      %22 = dma.hbm_to_vmem [thread:$0]  %s18, 128, %s20, [#allocation3]
    $region9: #{tpu_custom_call.1} parent=1 // pred_fallthru
      _
    // Predicated region
    $region10: #{tpu_custom_call.1} parent=1 // pred_check
      _
    $region11: #{tpu_custom_call.1} parent=1 // pred_check_branch
      %24 = sbr.rel (0) target = $region13
    $region12: #{tpu_custom_call.1} parent=1 // pred_region
      _
    $region13: #{tpu_custom_call.1} parent=1 // pred_fallthru
      _
    // Predicated region
    $region14: #{tpu_custom_call.1} parent=1 // pred_check
      _
    $region15: #{tpu_custom_call.1} parent=1 // pred_check_branch
      %26 = sbr.rel (0) target = $region17
    $region16: #{tpu_custom_call.1} parent=1 // pred_region
      %28 = dma.done [#allocation3], 128
    $region17: #{tpu_custom_call.1} parent=1 // pred_fallthru
      _
    %v29 = vld [vmem:[%s0] sm:$0xff]
    %v30 = vld [vmem:[#allocation2] sm:$0xff]
    %v31 = vld [vmem:[%s2] sm:$0xff]
    %v32 = vsub.f32 %v29, %v30
    %v33 = vmul.f32 %v32, %v32
    %vm34 = vcmask 261120
    %v35 = vsel %vm34, %v33, 0.0
    %36 = vadd.xlane.f32.xlu0 %v35
    %v37 = vpop.xlane.xlu0 %36
    %v38 = vrsqrt.pop %v37
    %v39 = vmul.f32 %v38, %v37
    %v40 = vmul.f32 %v39, %v38
    %v41 = vmul.f32 0.5, %v40
    %v42 = vsub.f32 1.5, %v41
    %v43 = vmul.f32 %v38, %v42
    %v44 = vmul.f32 %v37, %v43
    %vm45 = vcmp.eq.f32.partialorder %v37, inf
    %v46 = vsel %vm45, %v37, %v44
    %vm47 = vcmp.eq.f32.partialorder %v37, 0.0
    %v48 = vand.u32 %v37, 2147483648
    %v49 = vsel %vm47, %v48, %v46
    %v50 = vsub.f32 1.0, %v49
    %v51 = vmax.f32 %v50, 0.0
    %v52 = vmul.f32 %v31, %v37
    %v53 = vsub.f32 1.0, %v31
    %v54 = vmul.f32 %v51, %v51
    %v55 = vmul.f32 %v53, %v54
    %v56 = vadd.f32 %v52, %v55
    %s57 = smul.u32 0, 8
    %v58 = vlaneseq
    %v59 = vshrl.u32 %v58, 7
    %v60 = vstv %s57
    %v61 = vadd.s32 %v60, %v59
    %vm62 = vcmp.lt.s32.totalorder %v61, 8
    %v63 = vsel %vm62, %v56, 0.0
    %vm64 = vcmask 7168
    %v65 = vsel %vm64, %v63, 0.0
    %66 = vadd.xlane.f32.xlu0 %v65
    %v67 = vpop.xlane.xlu0 %66
    %v68 = vrot.slane %v67, 4
    %v69 = vadd.f32 %v67, %v68
    %v70 = vrot.slane %v69, 2
    %v71 = vadd.f32 %v69, %v70
    %v72 = vrot.slane %v71, 1
    %v73 = vadd.f32 %v71, %v72
    %s74 = vtos %v73
    %s75 = scalar_lea.smem [#allocation5], 0
    %76 = sst [smem:[%s75]] %s74
    // Predicated region
    $region18: #{tpu_custom_call.1} parent=1 // pred_check
      _
    $region19: #{tpu_custom_call.1} parent=1 // pred_check_branch
      %78 = sbr.rel (0) target = $region21
    $region20: #{tpu_custom_call.1} parent=1 // pred_region
      %80 = vsyncadd [#allocation4], 0
      %s82 = sshll.u32 %s3, 4
      %s83 = int_to_ptr.hbm [resolvable:$true] %s82
      %85 = dma.smem_to_hbm [#allocation5], 16, %s83, [#allocation4]
    $region21: #{tpu_custom_call.1} parent=1 // pred_fallthru
      _
    // Predicated region
    $region22: #{tpu_custom_call.1} parent=1 // pred_check
      _
    $region23: #{tpu_custom_call.1} parent=1 // pred_check_branch
      %87 = sbr.rel (0) target = $region25
    $region24: #{tpu_custom_call.1} parent=1 // pred_region
      %89 = dma.done [#allocation4], 16
    $region25: #{tpu_custom_call.1} parent=1 // pred_fallthru
      _
    %90 = sfence
    %91 = vsyncpa [#allocation3], 1
    %92 = vsyncpa [#allocation4], 1

</llo_original>
